<compile_context>
chip_gen: v7x
topology: tpu7x:2x2x1
jax: 0.10.0
libtpu: 0.0.40
codegen_flags: <defaults>
</compile_context>

<pallas_src>
import functools

import jax
import jax.numpy as jnp
from jax.experimental import pallas as pl
from jax.experimental.pallas import tpu as pltpu

# Finite stand-in for -inf (only diverges if real embeddings hit float32 min).
_SENTINEL = float(jnp.finfo(jnp.float32).min)


def _core_snapshot_kernel(prev_ref, qemb_ref, pad_ref, adj_ref, w_ref, b_ref,
                          out_ref, pooled_ref, any_ref, *, n_cores, n_qubits):
    """One (batch-block bb, qubit-tile qi) grid step.

    prev_ref : [Bb, Qt, 1] int32 core id per logical qubit (-1 = padding qubit)
    qemb_ref : [Bb, Qt, d] f32   qubit embeddings (unpadded feature dim)
    pad_ref  : [1, d]      f32   embedding for cores with no assigned qubit
    adj_ref  : [C, C]      f32   normalized core adjacency (SMEM, scalar reads)
    w_ref    : [d, d]      f32   GCN weight
    b_ref    : [1, d]      f32   GCN bias
    out_ref  : [Bb, C, d]  f32   output core embeddings (written on last qi)
    pooled_ref : [Bb, C, d] f32 VMEM  running segment-max accumulator
    any_ref    : [Bb, C, 1] f32 VMEM  per-core "has >=1 assigned qubit" flag
    """
    qi = pl.program_id(1)
    nq = pl.num_programs(1)
    bb_sz, qt, d = qemb_ref.shape

    @pl.when(qi == 0)
    def _init():
        pooled_ref[...] = jnp.full(pooled_ref.shape, _SENTINEL, pooled_ref.dtype)
        any_ref[...] = jnp.zeros(any_ref.shape, any_ref.dtype)

    prev = prev_ref[...]                       # [Bb, Qt, 1] int32
    qe = qemb_ref[...].astype(jnp.float32)     # [Bb, Qt, d]

    # Ragged Q tail: rows past n_qubits in the last tile hold unspecified data;
    # force their core id to -1 so they never match any core.  Statically
    # elided when Q divides the tile size (the common case / this demo).
    if n_qubits % qt != 0:
        row = jax.lax.broadcasted_iota(jnp.int32, (1, qt, 1), 1)
        prev = jnp.where(qi * qt + row < n_qubits, prev, -1)

    # One cross-lane broadcast of prev per tile, hoisted out of the core loop.
    prev_l = jnp.broadcast_to(prev, (bb_sz, qt, d))

    # Segment max over this qubit tile; static unroll over the small, static
    # core count keeps the working set at [Bb, Qt, d] — no [C, Q, d] tensor.
    max_rows, hit_rows = [], []
    for c in range(n_cores):
        sel = jnp.where(prev_l == c, qe, _SENTINEL)                  # [Bb,Qt,d]
        max_rows.append(jnp.max(sel, axis=1, keepdims=True))         # [Bb,1,d]
        hit = jnp.where(prev == c, 1.0, 0.0)                         # [Bb,Qt,1]
        hit_rows.append(jnp.max(hit, axis=1, keepdims=True))         # [Bb,1,1]
    pooled_ref[...] = jnp.maximum(pooled_ref[...],
                                  jnp.concatenate(max_rows, axis=1))
    any_ref[...] = jnp.maximum(any_ref[...],
                               jnp.concatenate(hit_rows, axis=1))

    @pl.when(qi == nq - 1)
    def _finalize():
        has_any = any_ref[...] > 0.5                                 # [Bb,C,1]
        pad = jnp.reshape(pad_ref[...], (1, 1, d))
        x = jnp.where(has_any, pooled_ref[...], pad)                 # [Bb,C,d]

        # Message passing (A_norm @ X) on the VPU: C is tiny, so unrolled
        # scalar-weighted sums beat a CxC MXU round-trip; adj lives in SMEM.
        msg_rows = []
        for c in range(n_cores):
            acc = adj_ref[c, 0] * x[:, 0:1, :]
            for j in range(1, n_cores):
                acc = acc + adj_ref[c, j] * x[:, j:j + 1, :]
            msg_rows.append(acc)
        msg = jnp.concatenate(msg_rows, axis=1)                      # [Bb,C,d]

        # Feature transform: one batched MXU pass over all Bb*C rows.
        h = jnp.dot(msg.reshape(bb_sz * n_cores, d), w_ref[...],
                    preferred_element_type=jnp.float32) + b_ref[...]
        h = jnp.maximum(h, 0.0).reshape(bb_sz, n_cores, d)
        out_ref[...] = h.astype(out_ref.dtype)


def precompute_adj_norm(core_con):
    """Static per-topology GCN normalization D^-1/2 (A + I) D^-1/2 (hoisted)."""
    C = core_con.shape[0]
    a_hat = core_con.astype(jnp.float32) + jnp.eye(C, dtype=jnp.float32)
    dis = jax.lax.rsqrt(jnp.sum(a_hat, axis=1))
    return a_hat * dis[:, None] * dis[None, :]


@functools.partial(jax.jit, static_argnames=("q_tile", "b_block"))
def core_snapshot_encoder_batched(prev_assign, q_embeddings, padding_emb,
                                  adj_norm, w, b, *, q_tile=2048, b_block=8):
    """Batched encoder.

    prev_assign  : [B, Q] int   - core index per logical qubit, per snapshot
    q_embeddings : [B, Q, d]    - qubit embeddings, per snapshot
    padding_emb  : [d]          - embedding for empty cores
    adj_norm     : [C, C]       - precomputed normalized adjacency (static)
    w, b         : [d, d], [d]  - GCN parameters
    returns      : [B, C, d]
    """
    B, Q = prev_assign.shape
    d = q_embeddings.shape[-1]
    C = adj_norm.shape[0]

    # Batch block: largest divisor of B not exceeding b_block.  With B/bb >= 2
    # the leading "parallel" axis shards across v7x's two TensorCores.
    bb = max(1, min(b_block, B))
    while B % bb:
        bb -= 1

    # Qubit tile: whole Q when it fits, else a multiple of 8 capped so the
    # double-buffered qemb block stays well inside scoped VMEM on every gen
    # (v7x: 32 MiB scoped / 64 MiB physical).
    budget = 8 * 1024 * 1024
    qt_cap = max(8, (budget // max(1, bb * d * 4)) // 8 * 8)
    qt_max = min(q_tile, qt_cap)
    qt = Q if Q <= qt_max else qt_max
    nq = (Q + qt - 1) // qt

    # Only prev_assign needs a (tiny) relayout; q_embeddings is read in place
    # (astype is a no-op when it is already f32).
    prev3 = prev_assign.astype(jnp.int32)[:, :, None]                # [B, Q, 1]
    qemb = q_embeddings.astype(jnp.float32)                          # [B, Q, d]
    pad2 = padding_emb.astype(jnp.float32)[None, :]                  # [1, d]
    b2 = b.astype(jnp.float32)[None, :]                              # [1, d]
    w2 = w.astype(jnp.float32)                                       # [d, d]
    adj = adj_norm.astype(jnp.float32)                               # [C, C]

    kernel = functools.partial(_core_snapshot_kernel, n_cores=C, n_qubits=Q)

    out = pl.pallas_call(
        kernel,
        out_shape=jax.ShapeDtypeStruct((B, C, d), jnp.float32),
        grid_spec=pltpu.PrefetchScalarGridSpec(
            num_scalar_prefetch=0,
            grid=(B // bb, nq),
            in_specs=[
                pl.BlockSpec((bb, qt, 1), lambda i, j: (i, j, 0)),
                pl.BlockSpec((bb, qt, d), lambda i, j: (i, j, 0)),
                pl.BlockSpec((1, d), lambda i, j: (0, 0)),
                pl.BlockSpec(memory_space=pltpu.MemorySpace.SMEM),   # adj -> SMEM
                pl.BlockSpec((d, d), lambda i, j: (0, 0)),
                pl.BlockSpec((1, d), lambda i, j: (0, 0)),
            ],
            out_specs=pl.BlockSpec((bb, C, d), lambda i, j: (i, 0, 0)),
            scratch_shapes=[
                pltpu.VMEM((bb, C, d), jnp.float32),   # running segment max
                pltpu.VMEM((bb, C, 1), jnp.float32),   # per-core "any qubit" flag
            ],
        ),
        compiler_params=pltpu.CompilerParams(
            dimension_semantics=("parallel", "arbitrary"),
            vmem_limit_bytes=32 * 1024 * 1024,
        ),
    )(prev3, qemb, pad2, adj, w2, b2)
    return out


def core_snapshot_encoder(prev_assign, q_embeddings, padding_emb, adj_norm, w, b):
    """Unbatched wrapper matching the PyTorch forward signature.

    Note: with a single snapshot one of v7x's two TensorCores idles — stack
    snapshots and call core_snapshot_encoder_batched when possible.
    """
    out = core_snapshot_encoder_batched(prev_assign[None], q_embeddings[None],
                                        padding_emb, adj_norm, w, b)
    return out[0]


def reference(prev_assign, q_embeddings, padding_emb, core_con, w, b):
    """Pure-JAX reference mirroring the PyTorch forward (single snapshot)."""
    C = core_con.shape[0]
    rows = []
    for c in range(C):
        m = prev_assign == c
        pooled = jnp.max(jnp.where(m[:, None], q_embeddings, -jnp.inf), axis=0)
        rows.append(jnp.where(jnp.any(m), pooled, padding_emb))
    core_embs = jnp.stack(rows)
    adj_norm = precompute_adj_norm(core_con)
    return jnp.maximum(adj_norm @ core_embs @ w + b[None, :], 0.0)


if __name__ == "__main__":
    key = jax.random.PRNGKey(0)
    k_q, k_w, k_b, k_a = jax.random.split(key, 4)

    B = 2          # snapshots batched into one pallas_call
    C = 4          # number of cores
    Q = 8          # number of logical qubits
    d_H = 32       # core / qubit embedding size (d_E == d_H assumed)

    # Core connectivity: 4-core ring (symmetric, zero diagonal).
    core_con = jnp.array(
        [[0, 1, 0, 1],
         [1, 0, 1, 0],
         [0, 1, 0, 1],
         [1, 0, 1, 0]], dtype=jnp.float32)
    adj_norm = precompute_adj_norm(core_con)   # static per topology

    # Previous assignments: maxval is exclusive, so core C-1 is intentionally
    # left empty in every snapshot to exercise the padding-embedding path.
    prev_assign = jax.random.randint(k_a, (B, Q), 0, C - 1, dtype=jnp.int32)
    q_embeddings = jax.random.normal(k_q, (B, Q, d_H), dtype=jnp.float32)

    # Deterministic parameters (module __init__ shapes).
    padding_emb = jnp.zeros((d_H,), dtype=jnp.float32)          # nn.Parameter(zeros)
    w = jax.random.normal(k_w, (d_H, d_H), dtype=jnp.float32) * 0.1
    b = jax.random.normal(k_b, (d_H,), dtype=jnp.float32) * 0.1

    out = core_snapshot_encoder_batched(prev_assign, q_embeddings, padding_emb,
                                        adj_norm, w, b)
    out = jax.block_until_ready(out)

    ref = jnp.stack([reference(prev_assign[i], q_embeddings[i], padding_emb,
                               core_con, w, b) for i in range(B)])
    assert out.shape == (B, C, d_H)
    assert jnp.allclose(out, ref, atol=1e-5, rtol=1e-5)

    # Unbatched path (matches the PyTorch forward signature) also works.
    out0 = jax.block_until_ready(
        core_snapshot_encoder(prev_assign[0], q_embeddings[0], padding_emb,
                              adj_norm, w, b))
    assert out0.shape == (C, d_H)
    assert jnp.allclose(out0, ref[0], atol=1e-5, rtol=1e-5)

    print("KERNEL_OK")
</pallas_src>

<mosaic_0001>
module attributes {stable_mosaic.version = 11 : i64} {
  func.func @_core_snapshot_kernel(%arg0: i32, %arg1: i32, %arg2: memref<2x8x1xi32, #tpu.memory_space<vmem>>, %arg3: memref<2x8x32xf32, #tpu.memory_space<vmem>>, %arg4: memref<1x32xf32, #tpu.memory_space<vmem>>, %arg5: memref<4x4xf32, #tpu.memory_space<smem>>, %arg6: memref<32x32xf32, #tpu.memory_space<vmem>>, %arg7: memref<1x32xf32, #tpu.memory_space<vmem>>, %arg8: memref<2x4x32xf32, #tpu.memory_space<vmem>>, %arg9: memref<2x4x32xf32, #tpu.memory_space<vmem>>, %arg10: memref<2x4x1xf32, #tpu.memory_space<vmem>>) attributes {dimension_semantics = [#tpu.dimension_semantics<parallel>, #tpu.dimension_semantics<arbitrary>], iteration_bounds = array<i64: 1, 1>, scalar_prefetch = 0 : i64, scratch_operands = 2 : i64, tpu.core_type = #tpu.core_type<tc>, window_params = [{transform_indices = @transform_0, window_bounds = array<i64: 2, 8, 1>}, {transform_indices = @transform_1, window_bounds = array<i64: 2, 8, 32>}, {pipeline_mode = #tpu.pipeline_mode<synchronous>, transform_indices = @transform_2, window_bounds = array<i64: 1, 32>}, {transform_indices = @transform_3, window_bounds = array<i64: 4, 4>}, {pipeline_mode = #tpu.pipeline_mode<synchronous>, transform_indices = @transform_4, window_bounds = array<i64: 32, 32>}, {pipeline_mode = #tpu.pipeline_mode<synchronous>, transform_indices = @transform_5, window_bounds = array<i64: 1, 32>}, {transform_indices = @transform_6, window_bounds = array<i64: 2, 4, 32>}]} {
    %c0_i32 = arith.constant 0 : i32
    %0 = arith.cmpi eq, %arg1, %c0_i32 : i32
    %1 = arith.extui %0 : i1 to i32
    %c0_i32_0 = arith.constant 0 : i32
    %2 = arith.cmpi ne, %1, %c0_i32_0 : i32
    scf.if %2 {
      %cst_44 = arith.constant -3.40282347E+38 : f32
      %70 = vector.broadcast %cst_44 : f32 to vector<2x4x32xf32>
      %c0_45 = arith.constant 0 : index
      %c0_46 = arith.constant 0 : index
      %c0_47 = arith.constant 0 : index
      %71 = vector.load %arg9[%c0_45, %c0_46, %c0_47] : memref<2x4x32xf32, #tpu.memory_space<vmem>>, vector<2x4x32xf32>
      tpu.vector_store %arg9[%c0_45, %c0_46, %c0_47], %70 {strides = array<i32>} : memref<2x4x32xf32, #tpu.memory_space<vmem>>, vector<2x4x32xf32>,
      %cst_48 = arith.constant 0.000000e+00 : f32
      %72 = vector.broadcast %cst_48 : f32 to vector<2x4x1xf32>
      %c0_49 = arith.constant 0 : index
      %c0_50 = arith.constant 0 : index
      %c0_51 = arith.constant 0 : index
      %73 = vector.load %arg10[%c0_49, %c0_50, %c0_51] : memref<2x4x1xf32, #tpu.memory_space<vmem>>, vector<2x4x1xf32>
      tpu.vector_store %arg10[%c0_49, %c0_50, %c0_51], %72 {strides = array<i32>} : memref<2x4x1xf32, #tpu.memory_space<vmem>>, vector<2x4x1xf32>,
    } else {
    }
    %c0 = arith.constant 0 : index
    %c0_1 = arith.constant 0 : index
    %c0_2 = arith.constant 0 : index
    %3 = vector.load %arg2[%c0, %c0_1, %c0_2] : memref<2x8x1xi32, #tpu.memory_space<vmem>>, vector<2x8x1xi32>
    %c0_3 = arith.constant 0 : index
    %c0_4 = arith.constant 0 : index
    %c0_5 = arith.constant 0 : index
    %4 = vector.load %arg3[%c0_3, %c0_4, %c0_5] : memref<2x8x32xf32, #tpu.memory_space<vmem>>, vector<2x8x32xf32>
    %5 = vector.shape_cast %3 : vector<2x8x1xi32> to vector<2x8x1xi32>
    %6 = vector.broadcast %5 : vector<2x8x1xi32> to vector<2x8x32xi32>
    %c0_i32_6 = arith.constant 0 : i32
    %7 = vector.broadcast %c0_i32_6 : i32 to vector<2x8x32xi32>
    %8 = arith.cmpi eq, %6, %7 : vector<2x8x32xi32>
    %cst = arith.constant -3.40282347E+38 : f32
    %9 = vector.broadcast %cst : f32 to vector<2x8x32xf32>
    %10 = arith.select %8, %4, %9 : vector<2x8x32xi1>, vector<2x8x32xf32>
    %cst_7 = arith.constant dense<0xFF800000> : vector<2x32xf32>
    %11 = vector.multi_reduction <maximumf>, %10, %cst_7 [1] : vector<2x8x32xf32> to vector<2x32xf32>
    %12 = vector.shape_cast %11 : vector<2x32xf32> to vector<2x1x32xf32>
    %c0_i32_8 = arith.constant 0 : i32
    %13 = vector.broadcast %c0_i32_8 : i32 to vector<2x8x1xi32>
    %14 = arith.cmpi eq, %3, %13 : vector<2x8x1xi32>
    %cst_9 = arith.constant 1.000000e+00 : f32
    %cst_10 = arith.constant 0.000000e+00 : f32
    %15 = vector.broadcast %cst_9 : f32 to vector<2x8x1xf32>
    %16 = vector.broadcast %cst_10 : f32 to vector<2x8x1xf32>
    %17 = arith.select %14, %15, %16 : vector<2x8x1xi1>, vector<2x8x1xf32>
    %cst_11 = arith.constant dense<0xFF800000> : vector<2x1xf32>
    %18 = vector.multi_reduction <maximumf>, %17, %cst_11 [1] : vector<2x8x1xf32> to vector<2x1xf32>
    %19 = vector.shape_cast %18 : vector<2x1xf32> to vector<2x1x1xf32>
    %c1_i32 = arith.constant 1 : i32
    %20 = vector.broadcast %c1_i32 : i32 to vector<2x8x32xi32>
    %21 = arith.cmpi eq, %6, %20 : vector<2x8x32xi32>
    %cst_12 = arith.constant -3.40282347E+38 : f32
    %22 = vector.broadcast %cst_12 : f32 to vector<2x8x32xf32>
    %23 = arith.select %21, %4, %22 : vector<2x8x32xi1>, vector<2x8x32xf32>
    %cst_13 = arith.constant dense<0xFF800000> : vector<2x32xf32>
    %24 = vector.multi_reduction <maximumf>, %23, %cst_13 [1] : vector<2x8x32xf32> to vector<2x32xf32>
    %25 = vector.shape_cast %24 : vector<2x32xf32> to vector<2x1x32xf32>
    %c1_i32_14 = arith.constant 1 : i32
    %26 = vector.broadcast %c1_i32_14 : i32 to vector<2x8x1xi32>
    %27 = arith.cmpi eq, %3, %26 : vector<2x8x1xi32>
    %cst_15 = arith.constant 1.000000e+00 : f32
    %cst_16 = arith.constant 0.000000e+00 : f32
    %28 = vector.broadcast %cst_15 : f32 to vector<2x8x1xf32>
    %29 = vector.broadcast %cst_16 : f32 to vector<2x8x1xf32>
    %30 = arith.select %27, %28, %29 : vector<2x8x1xi1>, vector<2x8x1xf32>
    %cst_17 = arith.constant dense<0xFF800000> : vector<2x1xf32>
    %31 = vector.multi_reduction <maximumf>, %30, %cst_17 [1] : vector<2x8x1xf32> to vector<2x1xf32>
    %32 = vector.shape_cast %31 : vector<2x1xf32> to vector<2x1x1xf32>
    %c2_i32 = arith.constant 2 : i32
    %33 = vector.broadcast %c2_i32 : i32 to vector<2x8x32xi32>
    %34 = arith.cmpi eq, %6, %33 : vector<2x8x32xi32>
    %cst_18 = arith.constant -3.40282347E+38 : f32
    %35 = vector.broadcast %cst_18 : f32 to vector<2x8x32xf32>
    %36 = arith.select %34, %4, %35 : vector<2x8x32xi1>, vector<2x8x32xf32>
    %cst_19 = arith.constant dense<0xFF800000> : vector<2x32xf32>
    %37 = vector.multi_reduction <maximumf>, %36, %cst_19 [1] : vector<2x8x32xf32> to vector<2x32xf32>
    %38 = vector.shape_cast %37 : vector<2x32xf32> to vector<2x1x32xf32>
    %c2_i32_20 = arith.constant 2 : i32
    %39 = vector.broadcast %c2_i32_20 : i32 to vector<2x8x1xi32>
    %40 = arith.cmpi eq, %3, %39 : vector<2x8x1xi32>
    %cst_21 = arith.constant 1.000000e+00 : f32
    %cst_22 = arith.constant 0.000000e+00 : f32
    %41 = vector.broadcast %cst_21 : f32 to vector<2x8x1xf32>
    %42 = vector.broadcast %cst_22 : f32 to vector<2x8x1xf32>
    %43 = arith.select %40, %41, %42 : vector<2x8x1xi1>, vector<2x8x1xf32>
    %cst_23 = arith.constant dense<0xFF800000> : vector<2x1xf32>
    %44 = vector.multi_reduction <maximumf>, %43, %cst_23 [1] : vector<2x8x1xf32> to vector<2x1xf32>
    %45 = vector.shape_cast %44 : vector<2x1xf32> to vector<2x1x1xf32>
    %c3_i32 = arith.constant 3 : i32
    %46 = vector.broadcast %c3_i32 : i32 to vector<2x8x32xi32>
    %47 = arith.cmpi eq, %6, %46 : vector<2x8x32xi32>
    %cst_24 = arith.constant -3.40282347E+38 : f32
    %48 = vector.broadcast %cst_24 : f32 to vector<2x8x32xf32>
    %49 = arith.select %47, %4, %48 : vector<2x8x32xi1>, vector<2x8x32xf32>
    %cst_25 = arith.constant dense<0xFF800000> : vector<2x32xf32>
    %50 = vector.multi_reduction <maximumf>, %49, %cst_25 [1] : vector<2x8x32xf32> to vector<2x32xf32>
    %51 = vector.shape_cast %50 : vector<2x32xf32> to vector<2x1x32xf32>
    %c3_i32_26 = arith.constant 3 : i32
    %52 = vector.broadcast %c3_i32_26 : i32 to vector<2x8x1xi32>
    %53 = arith.cmpi eq, %3, %52 : vector<2x8x1xi32>
    %cst_27 = arith.constant 1.000000e+00 : f32
    %cst_28 = arith.constant 0.000000e+00 : f32
    %54 = vector.broadcast %cst_27 : f32 to vector<2x8x1xf32>
    %55 = vector.broadcast %cst_28 : f32 to vector<2x8x1xf32>
    %56 = arith.select %53, %54, %55 : vector<2x8x1xi1>, vector<2x8x1xf32>
    %cst_29 = arith.constant dense<0xFF800000> : vector<2x1xf32>
    %57 = vector.multi_reduction <maximumf>, %56, %cst_29 [1] : vector<2x8x1xf32> to vector<2x1xf32>
    %58 = vector.shape_cast %57 : vector<2x1xf32> to vector<2x1x1xf32>
    %c0_30 = arith.constant 0 : index
    %c0_31 = arith.constant 0 : index
    %c0_32 = arith.constant 0 : index
    %59 = vector.load %arg9[%c0_30, %c0_31, %c0_32] : memref<2x4x32xf32, #tpu.memory_space<vmem>>, vector<2x4x32xf32>
    %60 = tpu.concatenate %12, %25, %38, %51 in 1 : vector<2x1x32xf32>, vector<2x1x32xf32>, vector<2x1x32xf32>, vector<2x1x32xf32> -> vector<2x4x32xf32>
    %61 = arith.maximumf %59, %60 : vector<2x4x32xf32>
    %c0_33 = arith.constant 0 : index
    %c0_34 = arith.constant 0 : index
    %c0_35 = arith.constant 0 : index
    %62 = vector.load %arg9[%c0_33, %c0_34, %c0_35] : memref<2x4x32xf32, #tpu.memory_space<vmem>>, vector<2x4x32xf32>
    tpu.vector_store %arg9[%c0_33, %c0_34, %c0_35], %61 {strides = array<i32>} : memref<2x4x32xf32, #tpu.memory_space<vmem>>, vector<2x4x32xf32>,
    %c0_36 = arith.constant 0 : index
    %c0_37 = arith.constant 0 : index
    %c0_38 = arith.constant 0 : index
    %63 = vector.load %arg10[%c0_36, %c0_37, %c0_38] : memref<2x4x1xf32, #tpu.memory_space<vmem>>, vector<2x4x1xf32>
    %64 = tpu.concatenate %19, %32, %45, %58 in 1 : vector<2x1x1xf32>, vector<2x1x1xf32>, vector<2x1x1xf32>, vector<2x1x1xf32> -> vector<2x4x1xf32>
    %65 = arith.maximumf %63, %64 : vector<2x4x1xf32>
    %c0_39 = arith.constant 0 : index
    %c0_40 = arith.constant 0 : index
    %c0_41 = arith.constant 0 : index
    %66 = vector.load %arg10[%c0_39, %c0_40, %c0_41] : memref<2x4x1xf32, #tpu.memory_space<vmem>>, vector<2x4x1xf32>
    tpu.vector_store %arg10[%c0_39, %c0_40, %c0_41], %65 {strides = array<i32>} : memref<2x4x1xf32, #tpu.memory_space<vmem>>, vector<2x4x1xf32>,
    %c0_i32_42 = arith.constant 0 : i32
    %67 = arith.cmpi eq, %arg1, %c0_i32_42 : i32
    %68 = arith.extui %67 : i1 to i32
    %c0_i32_43 = arith.constant 0 : i32
    %69 = arith.cmpi ne, %68, %c0_i32_43 : i32
    scf.if %69 {
      %c0_44 = arith.constant 0 : index
      %c0_45 = arith.constant 0 : index
      %c0_46 = arith.constant 0 : index
      %70 = vector.load %arg10[%c0_44, %c0_45, %c0_46] : memref<2x4x1xf32, #tpu.memory_space<vmem>>, vector<2x4x1xf32>
      %cst_47 = arith.constant 5.000000e-01 : f32
      %71 = vector.broadcast %cst_47 : f32 to vector<2x4x1xf32>
      %72 = arith.cmpf ogt, %70, %71 : vector<2x4x1xf32>
      %c0_48 = arith.constant 0 : index
      %c0_49 = arith.constant 0 : index
      %73 = vector.load %arg4[%c0_48, %c0_49] : memref<1x32xf32, #tpu.memory_space<vmem>>, vector<1x32xf32>
      %74 = vector.shape_cast %73 : vector<1x32xf32> to vector<1x1x32xf32>
      %c0_50 = arith.constant 0 : index
      %c0_51 = arith.constant 0 : index
      %c0_52 = arith.constant 0 : index
      %75 = vector.load %arg9[%c0_50, %c0_51, %c0_52] : memref<2x4x32xf32, #tpu.memory_space<vmem>>, vector<2x4x32xf32>
      %76 = vector.shape_cast %72 : vector<2x4x1xi1> to vector<2x4x1xi1>
      %77 = vector.broadcast %76 : vector<2x4x1xi1> to vector<2x4x32xi1>
      %78 = vector.shape_cast %74 : vector<1x1x32xf32> to vector<1x1x32xf32>
      %79 = vector.broadcast %78 : vector<1x1x32xf32> to vector<2x4x32xf32>
      %80 = arith.select %77, %75, %79 : vector<2x4x32xi1>, vector<2x4x32xf32>
      %c0_53 = arith.constant 0 : index
      %c0_54 = arith.constant 0 : index
      %81 = memref.load %arg5[%c0_53, %c0_54] : memref<4x4xf32, #tpu.memory_space<smem>>
      %82 = vector.extract_strided_slice %80 {offsets = [0, 0, 0], sizes = [2, 1, 32], strides = [1, 1, 1]} : vector<2x4x32xf32> to vector<2x1x32xf32>
      %83 = vector.broadcast %81 : f32 to vector<2x1x32xf32>
      %84 = arith.mulf %83, %82 : vector<2x1x32xf32>
      %c0_55 = arith.constant 0 : index
      %c1 = arith.constant 1 : index
      %85 = memref.load %arg5[%c0_55, %c1] : memref<4x4xf32, #tpu.memory_space<smem>>
      %86 = vector.extract_strided_slice %80 {offsets = [0, 1, 0], sizes = [2, 1, 32], strides = [1, 1, 1]} : vector<2x4x32xf32> to vector<2x1x32xf32>
      %87 = vector.broadcast %85 : f32 to vector<2x1x32xf32>
      %88 = arith.mulf %87, %86 : vector<2x1x32xf32>
      %89 = arith.addf %84, %88 : vector<2x1x32xf32>
      %c0_56 = arith.constant 0 : index
      %c2 = arith.constant 2 : index
      %90 = memref.load %arg5[%c0_56, %c2] : memref<4x4xf32, #tpu.memory_space<smem>>
      %91 = vector.extract_strided_slice %80 {offsets = [0, 2, 0], sizes = [2, 1, 32], strides = [1, 1, 1]} : vector<2x4x32xf32> to vector<2x1x32xf32>
      %92 = vector.broadcast %90 : f32 to vector<2x1x32xf32>
      %93 = arith.mulf %92, %91 : vector<2x1x32xf32>
      %94 = arith.addf %89, %93 : vector<2x1x32xf32>
      %c0_57 = arith.constant 0 : index
      %c3 = arith.constant 3 : index
      %95 = memref.load %arg5[%c0_57, %c3] : memref<4x4xf32, #tpu.memory_space<smem>>
      %96 = vector.extract_strided_slice %80 {offsets = [0, 3, 0], sizes = [2, 1, 32], strides = [1, 1, 1]} : vector<2x4x32xf32> to vector<2x1x32xf32>
      %97 = vector.broadcast %95 : f32 to vector<2x1x32xf32>
      %98 = arith.mulf %97, %96 : vector<2x1x32xf32>
      %99 = arith.addf %94, %98 : vector<2x1x32xf32>
      %c1_58 = arith.constant 1 : index
      %c0_59 = arith.constant 0 : index
      %100 = memref.load %arg5[%c1_58, %c0_59] : memref<4x4xf32, #tpu.memory_space<smem>>
      %101 = vector.extract_strided_slice %80 {offsets = [0, 0, 0], sizes = [2, 1, 32], strides = [1, 1, 1]} : vector<2x4x32xf32> to vector<2x1x32xf32>
      %102 = vector.broadcast %100 : f32 to vector<2x1x32xf32>
      %103 = arith.mulf %102, %101 : vector<2x1x32xf32>
      %c1_60 = arith.constant 1 : index
      %c1_61 = arith.constant 1 : index
      %104 = memref.load %arg5[%c1_60, %c1_61] : memref<4x4xf32, #tpu.memory_space<smem>>
      %105 = vector.extract_strided_slice %80 {offsets = [0, 1, 0], sizes = [2, 1, 32], strides = [1, 1, 1]} : vector<2x4x32xf32> to vector<2x1x32xf32>
      %106 = vector.broadcast %104 : f32 to vector<2x1x32xf32>
      %107 = arith.mulf %106, %105 : vector<2x1x32xf32>
      %108 = arith.addf %103, %107 : vector<2x1x32xf32>
      %c1_62 = arith.constant 1 : index
      %c2_63 = arith.constant 2 : index
      %109 = memref.load %arg5[%c1_62, %c2_63] : memref<4x4xf32, #tpu.memory_space<smem>>
      %110 = vector.extract_strided_slice %80 {offsets = [0, 2, 0], sizes = [2, 1, 32], strides = [1, 1, 1]} : vector<2x4x32xf32> to vector<2x1x32xf32>
      %111 = vector.broadcast %109 : f32 to vector<2x1x32xf32>
      %112 = arith.mulf %111, %110 : vector<2x1x32xf32>
      %113 = arith.addf %108, %112 : vector<2x1x32xf32>
      %c1_64 = arith.constant 1 : index
      %c3_65 = arith.constant 3 : index
      %114 = memref.load %arg5[%c1_64, %c3_65] : memref<4x4xf32, #tpu.memory_space<smem>>
      %115 = vector.extract_strided_slice %80 {offsets = [0, 3, 0], sizes = [2, 1, 32], strides = [1, 1, 1]} : vector<2x4x32xf32> to vector<2x1x32xf32>
      %116 = vector.broadcast %114 : f32 to vector<2x1x32xf32>
      %117 = arith.mulf %116, %115 : vector<2x1x32xf32>
      %118 = arith.addf %113, %117 : vector<2x1x32xf32>
      %c2_66 = arith.constant 2 : index
      %c0_67 = arith.constant 0 : index
      %119 = memref.load %arg5[%c2_66, %c0_67] : memref<4x4xf32, #tpu.memory_space<smem>>
      %120 = vector.extract_strided_slice %80 {offsets = [0, 0, 0], sizes = [2, 1, 32], strides = [1, 1, 1]} : vector<2x4x32xf32> to vector<2x1x32xf32>
      %121 = vector.broadcast %119 : f32 to vector<2x1x32xf32>
      %122 = arith.mulf %121, %120 : vector<2x1x32xf32>
      %c2_68 = arith.constant 2 : index
      %c1_69 = arith.constant 1 : index
      %123 = memref.load %arg5[%c2_68, %c1_69] : memref<4x4xf32, #tpu.memory_space<smem>>
      %124 = vector.extract_strided_slice %80 {offsets = [0, 1, 0], sizes = [2, 1, 32], strides = [1, 1, 1]} : vector<2x4x32xf32> to vector<2x1x32xf32>
      %125 = vector.broadcast %123 : f32 to vector<2x1x32xf32>
      %126 = arith.mulf %125, %124 : vector<2x1x32xf32>
      %127 = arith.addf %122, %126 : vector<2x1x32xf32>
      %c2_70 = arith.constant 2 : index
      %c2_71 = arith.constant 2 : index
      %128 = memref.load %arg5[%c2_70, %c2_71] : memref<4x4xf32, #tpu.memory_space<smem>>
      %129 = vector.extract_strided_slice %80 {offsets = [0, 2, 0], sizes = [2, 1, 32], strides = [1, 1, 1]} : vector<2x4x32xf32> to vector<2x1x32xf32>
      %130 = vector.broadcast %128 : f32 to vector<2x1x32xf32>
      %131 = arith.mulf %130, %129 : vector<2x1x32xf32>
      %132 = arith.addf %127, %131 : vector<2x1x32xf32>
      %c2_72 = arith.constant 2 : index
      %c3_73 = arith.constant 3 : index
      %133 = memref.load %arg5[%c2_72, %c3_73] : memref<4x4xf32, #tpu.memory_space<smem>>
      %134 = vector.extract_strided_slice %80 {offsets = [0, 3, 0], sizes = [2, 1, 32], strides = [1, 1, 1]} : vector<2x4x32xf32> to vector<2x1x32xf32>
      %135 = vector.broadcast %133 : f32 to vector<2x1x32xf32>
      %136 = arith.mulf %135, %134 : vector<2x1x32xf32>
      %137 = arith.addf %132, %136 : vector<2x1x32xf32>
      %c3_74 = arith.constant 3 : index
      %c0_75 = arith.constant 0 : index
      %138 = memref.load %arg5[%c3_74, %c0_75] : memref<4x4xf32, #tpu.memory_space<smem>>
      %139 = vector.extract_strided_slice %80 {offsets = [0, 0, 0], sizes = [2, 1, 32], strides = [1, 1, 1]} : vector<2x4x32xf32> to vector<2x1x32xf32>
      %140 = vector.broadcast %138 : f32 to vector<2x1x32xf32>
      %141 = arith.mulf %140, %139 : vector<2x1x32xf32>
      %c3_76 = arith.constant 3 : index
      %c1_77 = arith.constant 1 : index
      %142 = memref.load %arg5[%c3_76, %c1_77] : memref<4x4xf32, #tpu.memory_space<smem>>
      %143 = vector.extract_strided_slice %80 {offsets = [0, 1, 0], sizes = [2, 1, 32], strides = [1, 1, 1]} : vector<2x4x32xf32> to vector<2x1x32xf32>
      %144 = vector.broadcast %142 : f32 to vector<2x1x32xf32>
      %145 = arith.mulf %144, %143 : vector<2x1x32xf32>
      %146 = arith.addf %141, %145 : vector<2x1x32xf32>
      %c3_78 = arith.constant 3 : index
      %c2_79 = arith.constant 2 : index
      %147 = memref.load %arg5[%c3_78, %c2_79] : memref<4x4xf32, #tpu.memory_space<smem>>
      %148 = vector.extract_strided_slice %80 {offsets = [0, 2, 0], sizes = [2, 1, 32], strides = [1, 1, 1]} : vector<2x4x32xf32> to vector<2x1x32xf32>
      %149 = vector.broadcast %147 : f32 to vector<2x1x32xf32>
      %150 = arith.mulf %149, %148 : vector<2x1x32xf32>
      %151 = arith.addf %146, %150 : vector<2x1x32xf32>
      %c3_80 = arith.constant 3 : index
      %c3_81 = arith.constant 3 : index
      %152 = memref.load %arg5[%c3_80, %c3_81] : memref<4x4xf32, #tpu.memory_space<smem>>
      %153 = vector.extract_strided_slice %80 {offsets = [0, 3, 0], sizes = [2, 1, 32], strides = [1, 1, 1]} : vector<2x4x32xf32> to vector<2x1x32xf32>
      %154 = vector.broadcast %152 : f32 to vector<2x1x32xf32>
      %155 = arith.mulf %154, %153 : vector<2x1x32xf32>
      %156 = arith.addf %151, %155 : vector<2x1x32xf32>
      %157 = tpu.concatenate %99, %118, %137, %156 in 1 : vector<2x1x32xf32>, vector<2x1x32xf32>, vector<2x1x32xf32>, vector<2x1x32xf32> -> vector<2x4x32xf32>
      %158 = vector.shape_cast %157 : vector<2x4x32xf32> to vector<8x32xf32>
      %c0_82 = arith.constant 0 : index
      %c0_83 = arith.constant 0 : index
      %159 = vector.load %arg6[%c0_82, %c0_83] : memref<32x32xf32, #tpu.memory_space<vmem>>, vector<32x32xf32>
      %cst_84 = arith.constant dense<0.000000e+00> : vector<8x32xf32>
      %160 = tpu.matmul %158, %159, %cst_84 {dimension_numbers = #tpu.dot_dimension_numbers<[1], [0], [0], [1], [0, 0, 1, 1], [], []>} : vector<8x32xf32>, vector<32x32xf32>, vector<8x32xf32> -> vector<8x32xf32>
      %c0_85 = arith.constant 0 : index
      %c0_86 = arith.constant 0 : index
      %161 = vector.load %arg7[%c0_85, %c0_86] : memref<1x32xf32, #tpu.memory_space<vmem>>, vector<1x32xf32>
      %162 = vector.broadcast %161 : vector<1x32xf32> to vector<8x32xf32>
      %163 = arith.addf %160, %162 : vector<8x32xf32>
      %cst_87 = arith.constant 0.000000e+00 : f32
      %164 = vector.broadcast %cst_87 : f32 to vector<8x32xf32>
      %165 = arith.maximumf %163, %164 : vector<8x32xf32>
      %166 = vector.shape_cast %165 : vector<8x32xf32> to vector<2x4x32xf32>
      %c0_88 = arith.constant 0 : index
      %c0_89 = arith.constant 0 : index
      %c0_90 = arith.constant 0 : index
      %167 = vector.load %arg8[%c0_88, %c0_89, %c0_90] : memref<2x4x32xf32, #tpu.memory_space<vmem>>, vector<2x4x32xf32>
      tpu.vector_store %arg8[%c0_88, %c0_89, %c0_90], %166 {strides = array<i32>} : memref<2x4x32xf32, #tpu.memory_space<vmem>>, vector<2x4x32xf32>,
    } else {
    }
    return
  }
  func.func @transform_0(%arg0: i32, %arg1: i32) -> (i32, i32, i32) {
    %c0_i32 = arith.constant 0 : i32
    %c0_i32_0 = arith.constant 0 : i32
    return %arg0, %arg1, %c0_i32 : i32, i32, i32
  }
  func.func @transform_1(%arg0: i32, %arg1: i32) -> (i32, i32, i32) {
    %c0_i32 = arith.constant 0 : i32
    %c0_i32_0 = arith.constant 0 : i32
    return %arg0, %arg1, %c0_i32 : i32, i32, i32
  }
  func.func @transform_2(%arg0: i32, %arg1: i32) -> (i32, i32) {
    %c0_i32 = arith.constant 0 : i32
    %c0_i32_0 = arith.constant 0 : i32
    %c0_i32_1 = arith.constant 0 : i32
    return %c0_i32, %c0_i32_0 : i32, i32
  }
  func.func @transform_3(%arg0: i32, %arg1: i32) -> (i32, i32) {
    %c0_i32 = arith.constant 0 : i32
    %c0_i32_0 = arith.constant 0 : i32
    %c0_i32_1 = arith.constant 0 : i32
    return %c0_i32, %c0_i32_0 : i32, i32
  }
  func.func @transform_4(%arg0: i32, %arg1: i32) -> (i32, i32) {
    %c0_i32 = arith.constant 0 : i32
    %c0_i32_0 = arith.constant 0 : i32
    %c0_i32_1 = arith.constant 0 : i32
    return %c0_i32, %c0_i32_0 : i32, i32
  }
  func.func @transform_5(%arg0: i32, %arg1: i32) -> (i32, i32) {
    %c0_i32 = arith.constant 0 : i32
    %c0_i32_0 = arith.constant 0 : i32
    %c0_i32_1 = arith.constant 0 : i32
    return %c0_i32, %c0_i32_0 : i32, i32
  }
  func.func @transform_6(%arg0: i32, %arg1: i32) -> (i32, i32, i32) {
    %c0_i32 = arith.constant 0 : i32
    %c0_i32_0 = arith.constant 0 : i32
    %c0_i32_1 = arith.constant 0 : i32
    return %arg0, %c0_i32, %c0_i32_0 : i32, i32, i32
  }
}

</mosaic_0001>

<llo_original>
// kernel: core_snapshot_encoder_batched.1
$region0: #{core_snapshot_encoder_batched.1}
  #allocation0 [shape = 'u32[]', space=smem, size = 0x4, offset = 0x4, fixed_abs, tag = 'smem constant byte address 0x4 - core index']
  #allocation1 [shape = 'u32[144,128]{1,0:T(1,128)}', space=vmem, size = 0x12000, scoped, tag = 'internal scratch']
  #allocation2 [shape = 'f32[2,4,32]{2,1,0:T(4,128)}', space=vmem, size = 0x1000, scoped, tag = 'scratch operand']
  #allocation3 [shape = 'f32[2,4,1]{2,1,0:T(4,128)}', space=vmem, size = 0x1000, scoped, tag = 'scratch operand']
  %s0 = inlined_call_operand.vmem [shape: s32[2,8,1], index: 0, kind: input, shape index: {}]
  %s1 = inlined_call_operand.hbm [shape: f32[2,8,32], index: 1, kind: input, shape index: {}]
  %s2 = inlined_call_operand.vmem [shape: f32[1,32], index: 2, kind: input, shape index: {}]
  %s3 = inlined_call_operand.vmem [shape: f32[4,4], index: 3, kind: input, shape index: {}]
  %s4 = inlined_call_operand.vmem [shape: f32[32,32], index: 4, kind: input, shape index: {}]
  %s5 = inlined_call_operand.vmem [shape: f32[1,32], index: 5, kind: input, shape index: {}]
  %s6 = inlined_call_operand.hbm [shape: f32[2,4,32], index: 6, kind: output, shape index: {}]
  %s7 = sld [smem:[#allocation0]]
  $region50: #{core_snapshot_encoder_batched.1} parent=0
    _
  %s9 = ssub.s32 1, %s7
  %s10 = scalar_select 0, %s9, %s7
  $region1: #{core_snapshot_encoder_batched.1} parent=0
    #allocation4 [shape = 'u8[8192]{0}', space=vmem, size = 0x2000, scoped, tag = 'input window, operand 1, single buffered']
    #allocation5 [shape = 's32[1]{0}', space=sflag, size = 0x4, scoped, tag = 'scoped memory for core_snapshot_encoder_batched.1']
    #allocation6 [shape = 's32[1]{0}', space=sflag, size = 0x4, scoped, tag = 'scoped memory for core_snapshot_encoder_batched.1']
    #allocation7 [shape = 's32[1]{0}', space=sflag, size = 0x4, scoped, tag = 'scoped memory for core_snapshot_encoder_batched.1']
    #allocation8 [shape = 'u8[2048]{0}', space=smem, size = 0x800, scoped, tag = 'input window, operand 3, single buffered']
    #allocation9 [shape = 'u8[4096]{0}', space=vmem, size = 0x1000, scoped, tag = 'output window, operand 0, single buffered']
    %11 = vsyncpa [#allocation5], 0
    %12 = vsyncpa [#allocation7], 0
    %13 = vsyncpa [#allocation6], 0
    // Predicated region
    $region2: #{core_snapshot_encoder_batched.1} parent=1 // pred_check
      _
    $region3: #{core_snapshot_encoder_batched.1} parent=1 // pred_check_branch
      %15 = sbr.rel (0) target = $region5
    $region4: #{core_snapshot_encoder_batched.1} parent=1 // pred_region
      _
    $region5: #{core_snapshot_encoder_batched.1} parent=1 // pred_fallthru
      _
    // Predicated region
    $region6: #{core_snapshot_encoder_batched.1} parent=1 // pred_check
      _
    $region7: #{core_snapshot_encoder_batched.1} parent=1 // pred_check_branch
      %17 = sbr.rel (0) target = $region9
    $region8: #{core_snapshot_encoder_batched.1} parent=1 // pred_region
      %s19 = ssub.s32 256, 256
      %20 = vsyncadd [#allocation5], %s19
      %s21 = sshll.u32 [#allocation4], 4
      %s22 = int_to_ptr.vmem [resolvable:$true] %s21
      %27 = dma.hbm_to_vmem [thread:$0]  %s1, 256, %s22, [#allocation5], 128, 128, 8
    $region9: #{core_snapshot_encoder_batched.1} parent=1 // pred_fallthru
      _
    // Predicated region
    $region10: #{core_snapshot_encoder_batched.1} parent=1 // pred_check
      _
    $region11: #{core_snapshot_encoder_batched.1} parent=1 // pred_check_branch
      %29 = sbr.rel (0) target = $region13
    $region12: #{core_snapshot_encoder_batched.1} parent=1 // pred_region
      _
    $region13: #{core_snapshot_encoder_batched.1} parent=1 // pred_fallthru
      _
    // Predicated region
    $region14: #{core_snapshot_encoder_batched.1} parent=1 // pred_check
      _
    $region15: #{core_snapshot_encoder_batched.1} parent=1 // pred_check_branch
      %31 = sbr.rel (0) target = $region17
    $region16: #{core_snapshot_encoder_batched.1} parent=1 // pred_region
      %s33 = ssub.s32 64, 64
      %34 = vsyncadd [#allocation7], %s33
      %s36 = sshll.u32 %s3, 4
      %s37 = int_to_ptr.vmem [resolvable:$true] %s36
      %39 = dma.vmem_to_smem %s37, 64, [#allocation8], [#allocation7]
    $region17: #{core_snapshot_encoder_batched.1} parent=1 // pred_fallthru
      _
    // Predicated region
    $region18: #{core_snapshot_encoder_batched.1} parent=1 // pred_check
      _
    $region19: #{core_snapshot_encoder_batched.1} parent=1 // pred_check_branch
      %41 = sbr.rel (0) target = $region21
    $region20: #{core_snapshot_encoder_batched.1} parent=1 // pred_region
      _
    $region21: #{core_snapshot_encoder_batched.1} parent=1 // pred_fallthru
      _
    // Predicated region
    $region22: #{core_snapshot_encoder_batched.1} parent=1 // pred_check
      _
    $region23: #{core_snapshot_encoder_batched.1} parent=1 // pred_check_branch
      %43 = sbr.rel (0) target = $region25
    $region24: #{core_snapshot_encoder_batched.1} parent=1 // pred_region
      _
    $region25: #{core_snapshot_encoder_batched.1} parent=1 // pred_fallthru
      _
    // Predicated region
    $region26: #{core_snapshot_encoder_batched.1} parent=1 // pred_check
      _
    $region27: #{core_snapshot_encoder_batched.1} parent=1 // pred_check_branch
      %45 = sbr.rel (0) target = $region29
    $region28: #{core_snapshot_encoder_batched.1} parent=1 // pred_region
      %46 = dma.done [#allocation5], 256
    $region29: #{core_snapshot_encoder_batched.1} parent=1 // pred_fallthru
      _
    // Predicated region
    $region30: #{core_snapshot_encoder_batched.1} parent=1 // pred_check
      _
    $region31: #{core_snapshot_encoder_batched.1} parent=1 // pred_check_branch
      %48 = sbr.rel (0) target = $region33
    $region32: #{core_snapshot_encoder_batched.1} parent=1 // pred_region
      %49 = dma.done [#allocation7], 64
    $region33: #{core_snapshot_encoder_batched.1} parent=1 // pred_fallthru
      _
    %50 = sfence
    %p51 = scmp.eq.s32.totalorder 0, 0
    // Predicated region
    $region34: #{core_snapshot_encoder_batched.1} parent=1 // pred_check
      %p52 = pneg %p51
    $region35: #{core_snapshot_encoder_batched.1} parent=1 // pred_check_branch
      %54 = sbr.rel (%p52) target = $region37
    $region36: #{core_snapshot_encoder_batched.1} parent=1 // pred_region
      %vm55 = vcmask 257024
      %56 = vst.msk [vmem:[#allocation2] sm:$0xf] %vm55, -3.4028235e+38
      %57 = vst.msk [vmem:[#allocation2 + $0x4] sm:$0xf] %vm55, -3.4028235e+38
      %vm58 = vcmask 3072
      %59 = vst.msk [vmem:[#allocation3] sm:$0xf] %vm58, 0.0
      %60 = vst.msk [vmem:[#allocation3 + $0x4] sm:$0xf] %vm58, 0.0
    $region37: #{core_snapshot_encoder_batched.1} parent=1 // pred_fallthru
      _
    %v61 = vld [vmem:[%s0] sm:$0xff]
    %v62 = vld [vmem:[%s0 + $0x8] sm:$0xff]
    %v63 = vld [vmem:[#allocation4] sm:$0xff]
    %v64 = vld [vmem:[#allocation4 + $0x8] sm:$0xff]
    %65 = vset.pattern.permute.xlu0 0
    %66 = vperm.xlu0 %65, %v61
    %v67 = vpop.permute.xlu0 %66
    %68 = vset.pattern.permute.xlu0 0
    %69 = vperm.xlu0 %68, %v62
    %v70 = vpop.permute.xlu0 %69
    %vm71 = vcmp.eq.s32.totalorder %v67, 0
    %vm72 = vcmp.eq.s32.totalorder %v70, 0
    %v73 = vsel %vm71, %v63, -3.4028235e+38
    %v74 = vsel %vm72, %v64, -3.4028235e+38
    %vm75 = vcmask 261120
    %v76 = vsel %vm75, %v73, -inf
    %v77 = vrot.slane %v76, 4
    %v78 = vmax.f32 %v76, %v77
    %v79 = vrot.slane %v78, 2
    %v80 = vmax.f32 %v78, %v79
    %v81 = vrot.slane %v80, 1
    %v82 = vmax.f32 %v80, %v81
    %v83 = vsel %vm75, %v74, -inf
    %v84 = vrot.slane %v83, 4
    %v85 = vmax.f32 %v83, %v84
    %v86 = vrot.slane %v85, 2
    %v87 = vmax.f32 %v85, %v86
    %v88 = vrot.slane %v87, 1
    %v89 = vmax.f32 %v87, %v88
    %vm90 = vcmp.eq.s32.totalorder %v61, 0
    %vm91 = vcmp.eq.s32.totalorder %v62, 0
    %v92 = vsel %vm90, 1.0, 0.0
    %v93 = vsel %vm91, 1.0, 0.0
    %vm94 = vcmask 7168
    %v95 = vsel %vm94, %v92, -inf
    %v96 = vrot.slane %v95, 4
    %v97 = vmax.f32 %v95, %v96
    %v98 = vrot.slane %v97, 2
    %v99 = vmax.f32 %v97, %v98
    %v100 = vrot.slane %v99, 1
    %v101 = vmax.f32 %v99, %v100
    %v102 = vsel %vm94, %v93, -inf
    %v103 = vrot.slane %v102, 4
    %v104 = vmax.f32 %v102, %v103
    %v105 = vrot.slane %v104, 2
    %v106 = vmax.f32 %v104, %v105
    %v107 = vrot.slane %v106, 1
    %v108 = vmax.f32 %v106, %v107
    %vm109 = vcmp.eq.s32.totalorder %v67, 1
    %vm110 = vcmp.eq.s32.totalorder %v70, 1
    %v111 = vsel %vm109, %v63, -3.4028235e+38
    %v112 = vsel %vm110, %v64, -3.4028235e+38
    %v113 = vsel %vm75, %v111, -inf
    %v114 = vrot.slane %v113, 4
    %v115 = vmax.f32 %v113, %v114
    %v116 = vrot.slane %v115, 2
    %v117 = vmax.f32 %v115, %v116
    %v118 = vrot.slane %v117, 1
    %v119 = vmax.f32 %v117, %v118
    %v120 = vsel %vm75, %v112, -inf
    %v121 = vrot.slane %v120, 4
    %v122 = vmax.f32 %v120, %v121
    %v123 = vrot.slane %v122, 2
    %v124 = vmax.f32 %v122, %v123
    %v125 = vrot.slane %v124, 1
    %v126 = vmax.f32 %v124, %v125
    %vm127 = vcmp.eq.s32.totalorder %v61, 1
    %vm128 = vcmp.eq.s32.totalorder %v62, 1
    %v129 = vsel %vm127, 1.0, 0.0
    %v130 = vsel %vm128, 1.0, 0.0
    %v131 = vsel %vm94, %v129, -inf
    %v132 = vrot.slane %v131, 4
    %v133 = vmax.f32 %v131, %v132
    %v134 = vrot.slane %v133, 2
    %v135 = vmax.f32 %v133, %v134
    %v136 = vrot.slane %v135, 1
    %v137 = vmax.f32 %v135, %v136
    %v138 = vsel %vm94, %v130, -inf
    %v139 = vrot.slane %v138, 4
    %v140 = vmax.f32 %v138, %v139
    %v141 = vrot.slane %v140, 2
    %v142 = vmax.f32 %v140, %v141
    %v143 = vrot.slane %v142, 1
    %v144 = vmax.f32 %v142, %v143
    %vm145 = vcmp.eq.s32.totalorder %v67, 2
    %vm146 = vcmp.eq.s32.totalorder %v70, 2
    %v147 = vsel %vm145, %v63, -3.4028235e+38
    %v148 = vsel %vm146, %v64, -3.4028235e+38
    %v149 = vsel %vm75, %v147, -inf
    %v150 = vrot.slane %v149, 4
    %v151 = vmax.f32 %v149, %v150
    %v152 = vrot.slane %v151, 2
    %v153 = vmax.f32 %v151, %v152
    %v154 = vrot.slane %v153, 1
    %v155 = vmax.f32 %v153, %v154
    %v156 = vsel %vm75, %v148, -inf
    %v157 = vrot.slane %v156, 4
    %v158 = vmax.f32 %v156, %v157
    %v159 = vrot.slane %v158, 2
    %v160 = vmax.f32 %v158, %v159
    %v161 = vrot.slane %v160, 1
    %v162 = vmax.f32 %v160, %v161
    %vm163 = vcmp.eq.s32.totalorder %v61, 2
    %vm164 = vcmp.eq.s32.totalorder %v62, 2
    %v165 = vsel %vm163, 1.0, 0.0
    %v166 = vsel %vm164, 1.0, 0.0
    %v167 = vsel %vm94, %v165, -inf
    %v168 = vrot.slane %v167, 4
    %v169 = vmax.f32 %v167, %v168
    %v170 = vrot.slane %v169, 2
    %v171 = vmax.f32 %v169, %v170
    %v172 = vrot.slane %v171, 1
    %v173 = vmax.f32 %v171, %v172
    %v174 = vsel %vm94, %v166, -inf
    %v175 = vrot.slane %v174, 4
    %v176 = vmax.f32 %v174, %v175
    %v177 = vrot.slane %v176, 2
    %v178 = vmax.f32 %v176, %v177
    %v179 = vrot.slane %v178, 1
    %v180 = vmax.f32 %v178, %v179
    %vm181 = vcmp.eq.s32.totalorder %v67, 3
    %vm182 = vcmp.eq.s32.totalorder %v70, 3
    %v183 = vsel %vm181, %v63, -3.4028235e+38
    %v184 = vsel %vm182, %v64, -3.4028235e+38
    %v185 = vsel %vm75, %v183, -inf
    %v186 = vrot.slane %v185, 4
    %v187 = vmax.f32 %v185, %v186
    %v188 = vrot.slane %v187, 2
    %v189 = vmax.f32 %v187, %v188
    %v190 = vrot.slane %v189, 1
    %v191 = vmax.f32 %v189, %v190
    %v192 = vsel %vm75, %v184, -inf
    %v193 = vrot.slane %v192, 4
    %v194 = vmax.f32 %v192, %v193
    %v195 = vrot.slane %v194, 2
    %v196 = vmax.f32 %v194, %v195
    %v197 = vrot.slane %v196, 1
    %v198 = vmax.f32 %v196, %v197
    %vm199 = vcmp.eq.s32.totalorder %v61, 3
    %vm200 = vcmp.eq.s32.totalorder %v62, 3
    %v201 = vsel %vm199, 1.0, 0.0
    %v202 = vsel %vm200, 1.0, 0.0
    %v203 = vsel %vm94, %v201, -inf
    %v204 = vrot.slane %v203, 4
    %v205 = vmax.f32 %v203, %v204
    %v206 = vrot.slane %v205, 2
    %v207 = vmax.f32 %v205, %v206
    %v208 = vrot.slane %v207, 1
    %v209 = vmax.f32 %v207, %v208
    %v210 = vsel %vm94, %v202, -inf
    %v211 = vrot.slane %v210, 4
    %v212 = vmax.f32 %v210, %v211
    %v213 = vrot.slane %v212, 2
    %v214 = vmax.f32 %v212, %v213
    %v215 = vrot.slane %v214, 1
    %v216 = vmax.f32 %v214, %v215
    %v217 = vld [vmem:[#allocation2] sm:$0xf]
    %v218 = vld [vmem:[#allocation2 + $0x4] sm:$0xf]
    %vm219 = vcmask 1040384
    %v220 = vsel %vm219, %v82, %v119
    %v221 = vsel %vm219, %v89, %v126
    %vm222 = vcmask 1041408
    %v223 = vsel %vm222, %v220, %v155
    %v224 = vsel %vm222, %v221, %v162
    %vm225 = vcmask 1042432
    %v226 = vsel %vm225, %v223, %v191
    %v227 = vsel %vm225, %v224, %v198
    %v228 = vmax.f32 %v217, %v226
    %v229 = vmax.f32 %v218, %v227
    %vm230 = vcmask 257024
    %231 = vst.msk [vmem:[#allocation2] sm:$0xf] %vm230, %v228
    %232 = vst.msk [vmem:[#allocation2 + $0x4] sm:$0xf] %vm230, %v229
    %v233 = vld [vmem:[#allocation3] sm:$0xf]
    %v234 = vld [vmem:[#allocation3 + $0x4] sm:$0xf]
    %v235 = vsel %vm219, %v101, %v137
    %v236 = vsel %vm219, %v108, %v144
    %v237 = vsel %vm222, %v235, %v173
    %v238 = vsel %vm222, %v236, %v180
    %v239 = vsel %vm225, %v237, %v209
    %v240 = vsel %vm225, %v238, %v216
    %v241 = vmax.f32 %v233, %v239
    %v242 = vmax.f32 %v234, %v240
    %vm243 = vcmask 3072
    %244 = vst.msk [vmem:[#allocation3] sm:$0xf] %vm243, %v241
    %245 = vst.msk [vmem:[#allocation3 + $0x4] sm:$0xf] %vm243, %v242
    // Predicated region
    $region38: #{core_snapshot_encoder_batched.1} parent=1 // pred_check
      %p246 = pneg %p51
    $region39: #{core_snapshot_encoder_batched.1} parent=1 // pred_check_branch
      %248 = sbr.rel (%p246) target = $region41
    $region40: #{core_snapshot_encoder_batched.1} parent=1 // pred_region
      %v249 = vld [vmem:[#allocation3] sm:$0xf]
      %v250 = vld [vmem:[#allocation3 + $0x4] sm:$0xf]
      %vm251 = vcmp.gt.f32.partialorder %v249, 0.5
      %vm252 = vcmp.gt.f32.partialorder %v250, 0.5
      %v253 = vld [vmem:[%s2] sm:$0x1]
      %v254 = vld [vmem:[#allocation2] sm:$0xf]
      %v255 = vld [vmem:[#allocation2 + $0x4] sm:$0xf]
      %v256 = vsel %vm251, 1, 0
      %v257 = vsel %vm252, 1, 0
      %258 = vset.pattern.permute.xlu0 0
      %259 = vperm.xlu0 %258, %v256
      %v260 = vpop.permute.xlu0 %259
      %261 = vset.pattern.permute.xlu0 0
      %262 = vperm.xlu0 %261, %v257
      %v263 = vpop.permute.xlu0 %262
      %vm264 = vcmp.eq.s32.totalorder %v260, 1
      %vm265 = vcmp.eq.s32.totalorder %v263, 1
      %v267 = vlaneseq
      %v268 = vshrl.u32 %v267, 7
      %v269 = vsub.s32 0, %v268
      %v270 = vrot.slane %v253, %v269
      %v272 = vsel %vm264, %v254, %v270
      %v273 = vsel %vm265, %v255, %v270
      %s274 = sld [smem:[#allocation8]]
      %v275 = vstv %s274
      %v276 = vmul.f32 %v275, %v272
      %v277 = vmul.f32 %v275, %v273
      %s278 = sld [smem:[#allocation8 + $0x1]]
      %v279 = vstv %s278
      %v280 = vmul.f32 %v279, %v272
      %v281 = vmul.f32 %v279, %v273
      %v284 = vrot.slane %v280, 1
      %v285 = vrot.slane %v281, 1
      %v288 = vadd.f32 %v276, %v284
      %v289 = vadd.f32 %v277, %v285
      %s290 = sld [smem:[#allocation8 + $0x2]]
      %v291 = vstv %s290
      %v292 = vmul.f32 %v291, %v272
      %v293 = vmul.f32 %v291, %v273
      %v296 = vrot.slane %v292, 2
      %v297 = vrot.slane %v293, 2
      %v300 = vadd.f32 %v288, %v296
      %v301 = vadd.f32 %v289, %v297
      %s302 = sld [smem:[#allocation8 + $0x3]]
      %v303 = vstv %s302
      %v304 = vmul.f32 %v303, %v272
      %v305 = vmul.f32 %v303, %v273
      %v308 = vrot.slane %v304, 3
      %v309 = vrot.slane %v305, 3
      %v312 = vadd.f32 %v300, %v308
      %v313 = vadd.f32 %v301, %v309
      %s314 = sld [smem:[#allocation8 + $0x80]]
      %v315 = vstv %s314
      %v316 = vmul.f32 %v315, %v272
      %v317 = vmul.f32 %v315, %v273
      %s318 = sld [smem:[#allocation8 + $0x81]]
      %v319 = vstv %s318
      %v320 = vmul.f32 %v319, %v272
      %v321 = vmul.f32 %v319, %v273
      %v324 = vrot.slane %v320, 1
      %v325 = vrot.slane %v321, 1
      %v328 = vadd.f32 %v316, %v324
      %v329 = vadd.f32 %v317, %v325
      %s330 = sld [smem:[#allocation8 + $0x82]]
      %v331 = vstv %s330
      %v332 = vmul.f32 %v331, %v272
      %v333 = vmul.f32 %v331, %v273
      %v336 = vrot.slane %v332, 2
      %v337 = vrot.slane %v333, 2
      %v340 = vadd.f32 %v328, %v336
      %v341 = vadd.f32 %v329, %v337
      %s342 = sld [smem:[#allocation8 + $0x83]]
      %v343 = vstv %s342
      %v344 = vmul.f32 %v343, %v272
      %v345 = vmul.f32 %v343, %v273
      %v348 = vrot.slane %v344, 3
      %v349 = vrot.slane %v345, 3
      %v352 = vadd.f32 %v340, %v348
      %v353 = vadd.f32 %v341, %v349
      %s354 = sld [smem:[#allocation8 + $0x100]]
      %v355 = vstv %s354
      %v356 = vmul.f32 %v355, %v272
      %v357 = vmul.f32 %v355, %v273
      %s358 = sld [smem:[#allocation8 + $0x101]]
      %v359 = vstv %s358
      %v360 = vmul.f32 %v359, %v272
      %v361 = vmul.f32 %v359, %v273
      %v364 = vrot.slane %v360, 1
      %v365 = vrot.slane %v361, 1
      %v368 = vadd.f32 %v356, %v364
      %v369 = vadd.f32 %v357, %v365
      %s370 = sld [smem:[#allocation8 + $0x102]]
      %v371 = vstv %s370
      %v372 = vmul.f32 %v371, %v272
      %v373 = vmul.f32 %v371, %v273
      %v376 = vrot.slane %v372, 2
      %v377 = vrot.slane %v373, 2
      %v380 = vadd.f32 %v368, %v376
      %v381 = vadd.f32 %v369, %v377
      %s382 = sld [smem:[#allocation8 + $0x103]]
      %v383 = vstv %s382
      %v384 = vmul.f32 %v383, %v272
      %v385 = vmul.f32 %v383, %v273
      %v388 = vrot.slane %v384, 3
      %v389 = vrot.slane %v385, 3
      %v392 = vadd.f32 %v380, %v388
      %v393 = vadd.f32 %v381, %v389
      %s394 = sld [smem:[#allocation8 + $0x180]]
      %v395 = vstv %s394
      %v396 = vmul.f32 %v395, %v272
      %v397 = vmul.f32 %v395, %v273
      %s398 = sld [smem:[#allocation8 + $0x181]]
      %v399 = vstv %s398
      %v400 = vmul.f32 %v399, %v272
      %v401 = vmul.f32 %v399, %v273
      %v404 = vrot.slane %v400, 1
      %v405 = vrot.slane %v401, 1
      %v408 = vadd.f32 %v396, %v404
      %v409 = vadd.f32 %v397, %v405
      %s410 = sld [smem:[#allocation8 + $0x182]]
      %v411 = vstv %s410
      %v412 = vmul.f32 %v411, %v272
      %v413 = vmul.f32 %v411, %v273
      %v416 = vrot.slane %v412, 2
      %v417 = vrot.slane %v413, 2
      %v420 = vadd.f32 %v408, %v416
      %v421 = vadd.f32 %v409, %v417
      %s422 = sld [smem:[#allocation8 + $0x183]]
      %v423 = vstv %s422
      %v424 = vmul.f32 %v423, %v272
      %v425 = vmul.f32 %v423, %v273
      %v428 = vrot.slane %v424, 3
      %v429 = vrot.slane %v425, 3
      %v432 = vadd.f32 %v420, %v428
      %v433 = vadd.f32 %v421, %v429
      %v436 = vrot.slane %v352, 7
      %v437 = vrot.slane %v353, 7
      %v442 = vrot.slane %v392, 6
      %v443 = vrot.slane %v393, 6
      %v448 = vrot.slane %v432, 5
      %v449 = vrot.slane %v433, 5
      %v452 = vsel %vm219, %v312, %v436
      %v453 = vsel %vm219, %v313, %v437
      %v454 = vsel %vm222, %v452, %v442
      %v455 = vsel %vm222, %v453, %v443
      %v456 = vsel %vm225, %v454, %v448
      %v457 = vsel %vm225, %v455, %v449
      %v458 = vld [vmem:[%s4] sm:$0xff]
      %v459 = vld [vmem:[%s4 + $0x8] sm:$0xff]
      %v460 = vld [vmem:[%s4 + $0x10] sm:$0xff]
      %v461 = vld [vmem:[%s4 + $0x18] sm:$0xff]
      %v462 = vld [vmem:[%s5] sm:$0x1]
      %v464 = vlaneseq
      %v465 = vshrl.u32 %v464, 7
      %v466 = vsub.s32 0, %v465
      %v467 = vrot.slane %v462, %v466
      %v471 = vcombine.low %v456, %v457
      %v472 = vsel %vm75, %v471, 0
      %474 = vmatprep.subr.mxu0 0.0
      %475 = vmatpush1.msra.mxu0 %v458
      %476 = vmatprep.subr.mxu0 0.0
      %477 = vmatpush1.msra.mxu0 %v459
      %478 = vmatprep.subr.mxu0 0.0
      %479 = vmatpush1.msra.mxu0 %v460
      %480 = vmatprep.subr.mxu0 0.0
      %481 = vmatpush1.msra.mxu0 %v461
      %482 = vmatprep.subr.mxu0 0.0
      %483 = vmatpush1.msra.mxu0 0.0
      %484 = vmatprep.subr.mxu0 0.0
      %485 = vmatpush1.msra.mxu0 0.0
      %486 = vmatprep.subr.mxu0 0.0
      %487 = vmatpush1.msra.mxu0 0.0
      %488 = vmatprep.subr.mxu0 0.0
      %489 = vmatpush1.msra.mxu0 0.0
      %490 = vmatprep.subr.mxu0 0.0
      %491 = vmatpush1.msra.mxu0 0.0
      %492 = vmatprep.subr.mxu0 0.0
      %493 = vmatpush1.msra.mxu0 0.0
      %494 = vmatprep.subr.mxu0 0.0
      %495 = vmatpush1.msra.mxu0 0.0
      %496 = vmatprep.subr.mxu0 0.0
      %497 = vmatpush1.msra.mxu0 0.0
      %498 = vmatprep.subr.mxu0 0.0
      %499 = vmatpush1.msra.mxu0 0.0
      %500 = vmatprep.subr.mxu0 0.0
      %501 = vmatpush1.msra.mxu0 0.0
      %502 = vmatprep.subr.mxu0 0.0
      %503 = vmatpush1.msra.mxu0 0.0
      %504 = vmatprep.subr.mxu0 0.0
      %505 = vmatpush1.msra.mxu0 0.0
      %506 = vmatprep.subr.mxu0 0.0
      %507 = vmatpush1.msra.mxu0 0.0
      %508 = vmatprep.subr.mxu0 0.0
      %509 = vmatpush1.msra.mxu0 0.0
      %510 = vmatprep.subr.mxu0 0.0
      %511 = vmatpush1.msra.mxu0 0.0
      %512 = vmatprep.subr.mxu0 0.0
      %513 = vmatpush1.msra.mxu0 0.0
      %514 = vmatprep.subr.mxu0 0.0
      %515 = vmatpush1.msra.mxu0 0.0
      %516 = vmatprep.subr.mxu0 0.0
      %517 = vmatpush1.msra.mxu0 0.0
      %518 = vmatprep.subr.mxu0 0.0
      %519 = vmatpush1.msra.mxu0 0.0
      %520 = vmatprep.subr.mxu0 0.0
      %521 = vmatpush1.msra.mxu0 0.0
      %522 = vmatprep.subr.mxu0 0.0
      %523 = vmatpush1.msra.mxu0 0.0
      %524 = vmatprep.subr.mxu0 0.0
      %525 = vmatpush1.msra.mxu0 0.0
      %526 = vmatprep.subr.mxu0 0.0
      %527 = vmatpush1.msra.mxu0 0.0
      %528 = vmatprep.subr.mxu0 0.0
      %529 = vmatpush1.msra.mxu0 0.0
      %530 = vmatprep.subr.mxu0 0.0
      %531 = vmatpush1.msra.mxu0 0.0
      %532 = vmatprep.subr.mxu0 0.0
      %533 = vmatpush1.msra.mxu0 0.0
      %534 = vmatprep.subr.mxu0 0.0
      %535 = vmatpush1.msra.mxu0 0.0
      %536 = vmatprep.subr.mxu0 0.0
      %537 = vmatpush1.msra.mxu0 0.0
      %538 = vmatprep.mubr.f32.mxu0 0.0
      %539 = vmatmul.mubr.f32.gmra.mrb[0].mxu0 %v472
      %v540 = vpop.f32.mrb[0].mxu0
      %v541 = vadd.f32 %v467, %v540
      %v542 = vpop.f32.mrb[0].mxu0
      %543 = vdwg.mxu0
      %v544 = vmax.f32 %v541, 0.0
      %v546 = vcombine.high %v544, %v544
      %548 = vst.msk [vmem:[#allocation9] sm:$0xf] %vm230, %v544
      %549 = vst.msk [vmem:[#allocation9 + $0x4] sm:$0xf] %vm230, %v546
    $region41: #{core_snapshot_encoder_batched.1} parent=1 // pred_fallthru
      _
    // Predicated region
    $region42: #{core_snapshot_encoder_batched.1} parent=1 // pred_check
      _
    $region43: #{core_snapshot_encoder_batched.1} parent=1 // pred_check_branch
      %551 = sbr.rel (0) target = $region45
    $region44: #{core_snapshot_encoder_batched.1} parent=1 // pred_region
      %s553 = ssub.s32 128, 128
      %554 = vsyncadd [#allocation6], %s553
      %s555 = sshll.u32 [#allocation9], 4
      %s556 = int_to_ptr.vmem [resolvable:$true] %s555
      %561 = dma.vmem_to_hbm [thread:$0]  %s556, 128, %s6, [#allocation6], 64, 64, 4
    $region45: #{core_snapshot_encoder_batched.1} parent=1 // pred_fallthru
      _
    // Predicated region
    $region46: #{core_snapshot_encoder_batched.1} parent=1 // pred_check
      _
    $region47: #{core_snapshot_encoder_batched.1} parent=1 // pred_check_branch
      %563 = sbr.rel (0) target = $region49
    $region48: #{core_snapshot_encoder_batched.1} parent=1 // pred_region
      %564 = dma.done [#allocation6], 128
    $region49: #{core_snapshot_encoder_batched.1} parent=1 // pred_fallthru
      _
    %565 = vsyncpa [#allocation5], 1
    %566 = vsyncpa [#allocation6], 1
    %567 = vsyncpa [#allocation7], 1

</llo_original>
